<compile_context>
chip_gen: v6e
topology: v6e:2x2x1
jax: 0.10.0
libtpu: 0.0.40
codegen_flags: <defaults>
</compile_context>

<pallas_src>
import jax
import jax.numpy as jnp
from jax import lax
from jax.experimental import pallas as pl
from jax.experimental.pallas import tpu as pltpu


def _encoder_lstm_kernel(ids_ref, fused_tbl_ref, whh_t_ref, hc_out_ref):
    """ids:(S*B,1) i32, fused_tbl:(V,4H) f32, whh_t:(H,4H), hc_out:(2,B,H)."""
    _, B, H = hc_out_ref.shape
    SB = ids_ref.shape[0]
    S = SB // B
    V = fused_tbl_ref.shape[0]
    cdtype = whh_t_ref.dtype          # recurrent MXU operand dtype (f32/bf16)

    # Fused embedding gather + input projection + bias: one MXU matmul.
    # (Out-of-range ids give an all-zero one-hot row -> zero gates row,
    #  whereas nn.Embedding would raise; benign silent divergence.)
    ids = ids_ref[...]                                            # (S*B, 1)
    vocab_iota = lax.broadcasted_iota(jnp.int32, (SB, V), 1)
    one_hot = (vocab_iota == ids).astype(jnp.float32)
    gx = jnp.dot(one_hot, fused_tbl_ref[...],
                 preferred_element_type=jnp.float32)              # (S*B, 4H)
    # TODO(synk): training-mode dropout on the embedding is not implemented
    # (eval semantics: dropout == identity).

    whh_t = whh_t_ref[...]                                        # (H, 4H)

    h = jnp.zeros((B, H), jnp.float32)
    c = jnp.zeros((B, H), jnp.float32)
    # Fully unrolled recurrence (S small & static). Static row slices keep gx
    # in vregs: no VMEM scratch stores / misaligned partial loads on the
    # serial path.
    for t in range(S):
        gates = gx[t * B:(t + 1) * B, :] + jnp.dot(
            h.astype(cdtype), whh_t, preferred_element_type=jnp.float32)
        # Whole-tile EUP passes, then static lane slices (PyTorch order i,f,g,o).
        sig = jax.nn.sigmoid(gates)
        th = jnp.tanh(gates)
        i_g = sig[:, 0 * H:1 * H]
        f_g = sig[:, 1 * H:2 * H]
        g_g = th[:, 2 * H:3 * H]
        o_g = sig[:, 3 * H:4 * H]
        c = f_g * c + i_g * g_g
        h = o_g * jnp.tanh(c)

    hc_out_ref[0] = h.astype(hc_out_ref.dtype)
    hc_out_ref[1] = c.astype(hc_out_ref.dtype)


def prepare_encoder_params(params, *, use_bf16=False):
    """One-time weight preparation (hoisted out of the per-call path).

    Folds nn.Embedding and the LSTM input projection + both biases into a
    single (V, 4H) f32 table, and lays out W_hh^T in the MXU operand dtype.
    """
    H = params["w_hh"].shape[1]
    bias = (params["b_ih"] + params["b_hh"]).reshape(1, 4 * H)
    fused_tbl = (params["embedding"].astype(jnp.float32)
                 @ jnp.transpose(params["w_ih"]).astype(jnp.float32)
                 + bias)                                          # (V, 4H) f32
    cdtype = jnp.bfloat16 if use_bf16 else jnp.float32
    return {
        "fused_tbl": fused_tbl.astype(jnp.float32),               # keep f32
        "w_hh_t": jnp.transpose(params["w_hh"]).astype(cdtype),   # (H, 4H)
    }


def encoder_forward(prepared, x, *, training=False):
    """x: (seq_len, batch) int32 token ids. Returns (hidden, cell), each of
    shape (num_layers=1, batch, hidden_size)."""
    if training:
        # TODO(synk): training-mode dropout not implemented in the kernel.
        raise NotImplementedError("encoder_forward implements eval mode only")
    S, B = x.shape
    H = prepared["w_hh_t"].shape[0]
    ids2d = x.reshape(S * B, 1).astype(jnp.int32)

    vmem = pl.BlockSpec(memory_space=pltpu.MemorySpace.VMEM)
    hc = pl.pallas_call(
        _encoder_lstm_kernel,
        out_shape=jax.ShapeDtypeStruct((2, B, H), jnp.float32),
        in_specs=[vmem, vmem, vmem],      # full arrays resident in VMEM;
        out_specs=vmem,                   # no grid -> nothing to double-buffer
    )(ids2d, prepared["fused_tbl"], prepared["w_hh_t"])
    return hc[0][None, ...], hc[1][None, ...]


def init_encoder_params(key, input_size, embedding_size, hidden_size):
    """Deterministic synthetic parameters matching nn.Embedding + nn.LSTM shapes."""
    k_emb, k1, k2, k3, k4 = jax.random.split(key, 5)
    bound = 1.0 / jnp.sqrt(jnp.float32(hidden_size))
    u = lambda k, shape: jax.random.uniform(k, shape, jnp.float32, -bound, bound)
    return {
        "embedding": jax.random.normal(k_emb, (input_size, embedding_size),
                                       jnp.float32),
        "w_ih": u(k1, (4 * hidden_size, embedding_size)),
        "w_hh": u(k2, (4 * hidden_size, hidden_size)),
        "b_ih": u(k3, (4 * hidden_size,)),
        "b_hh": u(k4, (4 * hidden_size,)),
    }


def _reference_forward(params, x):
    """Pure-JAX reference (exact gather + lax.scan) to validate the kernel."""
    emb = jnp.take(params["embedding"], x, axis=0)
    H = params["w_hh"].shape[1]
    bias = params["b_ih"] + params["b_hh"]

    def step(carry, x_t):
        h, c = carry
        gates = x_t @ params["w_ih"].T + h @ params["w_hh"].T + bias
        i = jax.nn.sigmoid(gates[:, :H])
        f = jax.nn.sigmoid(gates[:, H:2 * H])
        g = jnp.tanh(gates[:, 2 * H:3 * H])
        o = jax.nn.sigmoid(gates[:, 3 * H:])
        c = f * c + i * g
        h = o * jnp.tanh(c)
        return (h, c), None

    B = x.shape[1]
    init = (jnp.zeros((B, H), jnp.float32), jnp.zeros((B, H), jnp.float32))
    (h, c), _ = lax.scan(step, init, emb)
    return h[None, ...], c[None, ...]


if __name__ == "__main__":
    # Small shapes consistent with the module: vocab=50, emb=16, hidden=32
    # (4H == 128 lanes), seq_len=8, batch=4, num_layers=1.
    input_size, embedding_size, hidden_size_, seq_len, batch = 50, 16, 32, 8, 4

    key = jax.random.PRNGKey(0)
    k_params, k_tok = jax.random.split(key)
    params = init_encoder_params(k_params, input_size, embedding_size,
                                 hidden_size_)
    x = jax.random.randint(k_tok, (seq_len, batch), 0, input_size,
                           dtype=jnp.int32)

    h_ref, c_ref = _reference_forward(params, x)

    # f32 MXU operands (tight check).
    prepared_f32 = prepare_encoder_params(params, use_bf16=False)
    hidden, cell = encoder_forward(prepared_f32, x)
    jax.block_until_ready((hidden, cell))
    assert hidden.shape == (1, batch, hidden_size_)
    assert cell.shape == (1, batch, hidden_size_)
    assert jnp.allclose(hidden, h_ref, atol=1e-4, rtol=1e-4)
    assert jnp.allclose(cell, c_ref, atol=1e-4, rtol=1e-4)

    # bf16 recurrent weight (MXU is bf16-native on v5e/v6e/v7x); fused table,
    # gates, state and elementwise math stay f32.
    prepared_bf16 = prepare_encoder_params(params, use_bf16=True)
    hidden_bf, cell_bf = encoder_forward(prepared_bf16, x)
    jax.block_until_ready((hidden_bf, cell_bf))
    assert jnp.allclose(hidden_bf, h_ref, atol=3e-2, rtol=3e-2)
    assert jnp.allclose(cell_bf, c_ref, atol=3e-2, rtol=3e-2)

    print("KERNEL_OK")
</pallas_src>

<mosaic_0001>
module attributes {stable_mosaic.version = 11 : i64} {
  func.func @_encoder_lstm_kernel(%arg0: memref<32x1xi32, #tpu.memory_space<vmem>>, %arg1: memref<50x128xf32, #tpu.memory_space<vmem>>, %arg2: memref<32x128xf32, #tpu.memory_space<vmem>>, %arg3: memref<2x4x32xf32, #tpu.memory_space<vmem>>) attributes {dimension_semantics = [], scalar_prefetch = 0 : i64, scratch_operands = 0 : i64, tpu.core_type = #tpu.core_type<tc>} {
    %c0 = arith.constant 0 : index
    %c0_0 = arith.constant 0 : index
    %0 = vector.load %arg0[%c0, %c0_0] : memref<32x1xi32, #tpu.memory_space<vmem>>, vector<32x1xi32>
    %1 = tpu.iota {dimensions = array<i32: 1>} : vector<32x50xi32>
    %2 = vector.broadcast %0 : vector<32x1xi32> to vector<32x50xi32>
    %3 = arith.cmpi eq, %1, %2 : vector<32x50xi32>
    %4 = arith.extui %3 : vector<32x50xi1> to vector<32x50xi32>
    %5 = arith.sitofp %4 : vector<32x50xi32> to vector<32x50xf32>
    %c0_1 = arith.constant 0 : index
    %c0_2 = arith.constant 0 : index
    %6 = vector.load %arg1[%c0_1, %c0_2] : memref<50x128xf32, #tpu.memory_space<vmem>>, vector<50x128xf32>
    %cst = arith.constant dense<0.000000e+00> : vector<32x128xf32>
    %7 = tpu.matmul %5, %6, %cst {dimension_numbers = #tpu.dot_dimension_numbers<[1], [0], [0], [1], [0, 0, 1, 1], [], []>} : vector<32x50xf32>, vector<50x128xf32>, vector<32x128xf32> -> vector<32x128xf32>
    %c0_3 = arith.constant 0 : index
    %c0_4 = arith.constant 0 : index
    %8 = vector.load %arg2[%c0_3, %c0_4] : memref<32x128xf32, #tpu.memory_space<vmem>>, vector<32x128xf32>
    %cst_5 = arith.constant 0.000000e+00 : f32
    %9 = vector.broadcast %cst_5 : f32 to vector<4x32xf32>
    %cst_6 = arith.constant 0.000000e+00 : f32
    %10 = vector.broadcast %cst_6 : f32 to vector<4x32xf32>
    %11 = vector.extract_strided_slice %7 {offsets = [0, 0], sizes = [4, 128], strides = [1, 1]} : vector<32x128xf32> to vector<4x128xf32>
    %cst_7 = arith.constant dense<0.000000e+00> : vector<4x128xf32>
    %12 = tpu.matmul %9, %8, %cst_7 {dimension_numbers = #tpu.dot_dimension_numbers<[1], [0], [0], [1], [0, 0, 1, 1], [], []>} : vector<4x32xf32>, vector<32x128xf32>, vector<4x128xf32> -> vector<4x128xf32>
    %13 = arith.addf %11, %12 : vector<4x128xf32>
    %14 = arith.negf %13 : vector<4x128xf32>
    %15 = math.exp %14 : vector<4x128xf32>
    %cst_8 = arith.constant 1.000000e+00 : f32
    %16 = vector.broadcast %cst_8 : f32 to vector<4x128xf32>
    %17 = arith.addf %16, %15 : vector<4x128xf32>
    %18 = arith.divf %16, %17 : vector<4x128xf32>
    %19 = math.tanh %13 : vector<4x128xf32>
    %20 = vector.extract_strided_slice %18 {offsets = [0, 0], sizes = [4, 32], strides = [1, 1]} : vector<4x128xf32> to vector<4x32xf32>
    %21 = vector.extract_strided_slice %18 {offsets = [0, 32], sizes = [4, 32], strides = [1, 1]} : vector<4x128xf32> to vector<4x32xf32>
    %22 = vector.extract_strided_slice %19 {offsets = [0, 64], sizes = [4, 32], strides = [1, 1]} : vector<4x128xf32> to vector<4x32xf32>
    %23 = vector.extract_strided_slice %18 {offsets = [0, 96], sizes = [4, 32], strides = [1, 1]} : vector<4x128xf32> to vector<4x32xf32>
    %24 = arith.mulf %21, %10 : vector<4x32xf32>
    %25 = arith.mulf %20, %22 : vector<4x32xf32>
    %26 = arith.addf %24, %25 : vector<4x32xf32>
    %27 = math.tanh %26 : vector<4x32xf32>
    %28 = arith.mulf %23, %27 : vector<4x32xf32>
    %29 = vector.extract_strided_slice %7 {offsets = [4, 0], sizes = [4, 128], strides = [1, 1]} : vector<32x128xf32> to vector<4x128xf32>
    %cst_9 = arith.constant dense<0.000000e+00> : vector<4x128xf32>
    %30 = tpu.matmul %28, %8, %cst_9 {dimension_numbers = #tpu.dot_dimension_numbers<[1], [0], [0], [1], [0, 0, 1, 1], [], []>} : vector<4x32xf32>, vector<32x128xf32>, vector<4x128xf32> -> vector<4x128xf32>
    %31 = arith.addf %29, %30 : vector<4x128xf32>
    %32 = arith.negf %31 : vector<4x128xf32>
    %33 = math.exp %32 : vector<4x128xf32>
    %cst_10 = arith.constant 1.000000e+00 : f32
    %34 = vector.broadcast %cst_10 : f32 to vector<4x128xf32>
    %35 = arith.addf %34, %33 : vector<4x128xf32>
    %36 = arith.divf %34, %35 : vector<4x128xf32>
    %37 = math.tanh %31 : vector<4x128xf32>
    %38 = vector.extract_strided_slice %36 {offsets = [0, 0], sizes = [4, 32], strides = [1, 1]} : vector<4x128xf32> to vector<4x32xf32>
    %39 = vector.extract_strided_slice %36 {offsets = [0, 32], sizes = [4, 32], strides = [1, 1]} : vector<4x128xf32> to vector<4x32xf32>
    %40 = vector.extract_strided_slice %37 {offsets = [0, 64], sizes = [4, 32], strides = [1, 1]} : vector<4x128xf32> to vector<4x32xf32>
    %41 = vector.extract_strided_slice %36 {offsets = [0, 96], sizes = [4, 32], strides = [1, 1]} : vector<4x128xf32> to vector<4x32xf32>
    %42 = arith.mulf %39, %26 : vector<4x32xf32>
    %43 = arith.mulf %38, %40 : vector<4x32xf32>
    %44 = arith.addf %42, %43 : vector<4x32xf32>
    %45 = math.tanh %44 : vector<4x32xf32>
    %46 = arith.mulf %41, %45 : vector<4x32xf32>
    %47 = vector.extract_strided_slice %7 {offsets = [8, 0], sizes = [4, 128], strides = [1, 1]} : vector<32x128xf32> to vector<4x128xf32>
    %cst_11 = arith.constant dense<0.000000e+00> : vector<4x128xf32>
    %48 = tpu.matmul %46, %8, %cst_11 {dimension_numbers = #tpu.dot_dimension_numbers<[1], [0], [0], [1], [0, 0, 1, 1], [], []>} : vector<4x32xf32>, vector<32x128xf32>, vector<4x128xf32> -> vector<4x128xf32>
    %49 = arith.addf %47, %48 : vector<4x128xf32>
    %50 = arith.negf %49 : vector<4x128xf32>
    %51 = math.exp %50 : vector<4x128xf32>
    %cst_12 = arith.constant 1.000000e+00 : f32
    %52 = vector.broadcast %cst_12 : f32 to vector<4x128xf32>
    %53 = arith.addf %52, %51 : vector<4x128xf32>
    %54 = arith.divf %52, %53 : vector<4x128xf32>
    %55 = math.tanh %49 : vector<4x128xf32>
    %56 = vector.extract_strided_slice %54 {offsets = [0, 0], sizes = [4, 32], strides = [1, 1]} : vector<4x128xf32> to vector<4x32xf32>
    %57 = vector.extract_strided_slice %54 {offsets = [0, 32], sizes = [4, 32], strides = [1, 1]} : vector<4x128xf32> to vector<4x32xf32>
    %58 = vector.extract_strided_slice %55 {offsets = [0, 64], sizes = [4, 32], strides = [1, 1]} : vector<4x128xf32> to vector<4x32xf32>
    %59 = vector.extract_strided_slice %54 {offsets = [0, 96], sizes = [4, 32], strides = [1, 1]} : vector<4x128xf32> to vector<4x32xf32>
    %60 = arith.mulf %57, %44 : vector<4x32xf32>
    %61 = arith.mulf %56, %58 : vector<4x32xf32>
    %62 = arith.addf %60, %61 : vector<4x32xf32>
    %63 = math.tanh %62 : vector<4x32xf32>
    %64 = arith.mulf %59, %63 : vector<4x32xf32>
    %65 = vector.extract_strided_slice %7 {offsets = [12, 0], sizes = [4, 128], strides = [1, 1]} : vector<32x128xf32> to vector<4x128xf32>
    %cst_13 = arith.constant dense<0.000000e+00> : vector<4x128xf32>
    %66 = tpu.matmul %64, %8, %cst_13 {dimension_numbers = #tpu.dot_dimension_numbers<[1], [0], [0], [1], [0, 0, 1, 1], [], []>} : vector<4x32xf32>, vector<32x128xf32>, vector<4x128xf32> -> vector<4x128xf32>
    %67 = arith.addf %65, %66 : vector<4x128xf32>
    %68 = arith.negf %67 : vector<4x128xf32>
    %69 = math.exp %68 : vector<4x128xf32>
    %cst_14 = arith.constant 1.000000e+00 : f32
    %70 = vector.broadcast %cst_14 : f32 to vector<4x128xf32>
    %71 = arith.addf %70, %69 : vector<4x128xf32>
    %72 = arith.divf %70, %71 : vector<4x128xf32>
    %73 = math.tanh %67 : vector<4x128xf32>
    %74 = vector.extract_strided_slice %72 {offsets = [0, 0], sizes = [4, 32], strides = [1, 1]} : vector<4x128xf32> to vector<4x32xf32>
    %75 = vector.extract_strided_slice %72 {offsets = [0, 32], sizes = [4, 32], strides = [1, 1]} : vector<4x128xf32> to vector<4x32xf32>
    %76 = vector.extract_strided_slice %73 {offsets = [0, 64], sizes = [4, 32], strides = [1, 1]} : vector<4x128xf32> to vector<4x32xf32>
    %77 = vector.extract_strided_slice %72 {offsets = [0, 96], sizes = [4, 32], strides = [1, 1]} : vector<4x128xf32> to vector<4x32xf32>
    %78 = arith.mulf %75, %62 : vector<4x32xf32>
    %79 = arith.mulf %74, %76 : vector<4x32xf32>
    %80 = arith.addf %78, %79 : vector<4x32xf32>
    %81 = math.tanh %80 : vector<4x32xf32>
    %82 = arith.mulf %77, %81 : vector<4x32xf32>
    %83 = vector.extract_strided_slice %7 {offsets = [16, 0], sizes = [4, 128], strides = [1, 1]} : vector<32x128xf32> to vector<4x128xf32>
    %cst_15 = arith.constant dense<0.000000e+00> : vector<4x128xf32>
    %84 = tpu.matmul %82, %8, %cst_15 {dimension_numbers = #tpu.dot_dimension_numbers<[1], [0], [0], [1], [0, 0, 1, 1], [], []>} : vector<4x32xf32>, vector<32x128xf32>, vector<4x128xf32> -> vector<4x128xf32>
    %85 = arith.addf %83, %84 : vector<4x128xf32>
    %86 = arith.negf %85 : vector<4x128xf32>
    %87 = math.exp %86 : vector<4x128xf32>
    %cst_16 = arith.constant 1.000000e+00 : f32
    %88 = vector.broadcast %cst_16 : f32 to vector<4x128xf32>
    %89 = arith.addf %88, %87 : vector<4x128xf32>
    %90 = arith.divf %88, %89 : vector<4x128xf32>
    %91 = math.tanh %85 : vector<4x128xf32>
    %92 = vector.extract_strided_slice %90 {offsets = [0, 0], sizes = [4, 32], strides = [1, 1]} : vector<4x128xf32> to vector<4x32xf32>
    %93 = vector.extract_strided_slice %90 {offsets = [0, 32], sizes = [4, 32], strides = [1, 1]} : vector<4x128xf32> to vector<4x32xf32>
    %94 = vector.extract_strided_slice %91 {offsets = [0, 64], sizes = [4, 32], strides = [1, 1]} : vector<4x128xf32> to vector<4x32xf32>
    %95 = vector.extract_strided_slice %90 {offsets = [0, 96], sizes = [4, 32], strides = [1, 1]} : vector<4x128xf32> to vector<4x32xf32>
    %96 = arith.mulf %93, %80 : vector<4x32xf32>
    %97 = arith.mulf %92, %94 : vector<4x32xf32>
    %98 = arith.addf %96, %97 : vector<4x32xf32>
    %99 = math.tanh %98 : vector<4x32xf32>
    %100 = arith.mulf %95, %99 : vector<4x32xf32>
    %101 = vector.extract_strided_slice %7 {offsets = [20, 0], sizes = [4, 128], strides = [1, 1]} : vector<32x128xf32> to vector<4x128xf32>
    %cst_17 = arith.constant dense<0.000000e+00> : vector<4x128xf32>
    %102 = tpu.matmul %100, %8, %cst_17 {dimension_numbers = #tpu.dot_dimension_numbers<[1], [0], [0], [1], [0, 0, 1, 1], [], []>} : vector<4x32xf32>, vector<32x128xf32>, vector<4x128xf32> -> vector<4x128xf32>
    %103 = arith.addf %101, %102 : vector<4x128xf32>
    %104 = arith.negf %103 : vector<4x128xf32>
    %105 = math.exp %104 : vector<4x128xf32>
    %cst_18 = arith.constant 1.000000e+00 : f32
    %106 = vector.broadcast %cst_18 : f32 to vector<4x128xf32>
    %107 = arith.addf %106, %105 : vector<4x128xf32>
    %108 = arith.divf %106, %107 : vector<4x128xf32>
    %109 = math.tanh %103 : vector<4x128xf32>
    %110 = vector.extract_strided_slice %108 {offsets = [0, 0], sizes = [4, 32], strides = [1, 1]} : vector<4x128xf32> to vector<4x32xf32>
    %111 = vector.extract_strided_slice %108 {offsets = [0, 32], sizes = [4, 32], strides = [1, 1]} : vector<4x128xf32> to vector<4x32xf32>
    %112 = vector.extract_strided_slice %109 {offsets = [0, 64], sizes = [4, 32], strides = [1, 1]} : vector<4x128xf32> to vector<4x32xf32>
    %113 = vector.extract_strided_slice %108 {offsets = [0, 96], sizes = [4, 32], strides = [1, 1]} : vector<4x128xf32> to vector<4x32xf32>
    %114 = arith.mulf %111, %98 : vector<4x32xf32>
    %115 = arith.mulf %110, %112 : vector<4x32xf32>
    %116 = arith.addf %114, %115 : vector<4x32xf32>
    %117 = math.tanh %116 : vector<4x32xf32>
    %118 = arith.mulf %113, %117 : vector<4x32xf32>
    %119 = vector.extract_strided_slice %7 {offsets = [24, 0], sizes = [4, 128], strides = [1, 1]} : vector<32x128xf32> to vector<4x128xf32>
    %cst_19 = arith.constant dense<0.000000e+00> : vector<4x128xf32>
    %120 = tpu.matmul %118, %8, %cst_19 {dimension_numbers = #tpu.dot_dimension_numbers<[1], [0], [0], [1], [0, 0, 1, 1], [], []>} : vector<4x32xf32>, vector<32x128xf32>, vector<4x128xf32> -> vector<4x128xf32>
    %121 = arith.addf %119, %120 : vector<4x128xf32>
    %122 = arith.negf %121 : vector<4x128xf32>
    %123 = math.exp %122 : vector<4x128xf32>
    %cst_20 = arith.constant 1.000000e+00 : f32
    %124 = vector.broadcast %cst_20 : f32 to vector<4x128xf32>
    %125 = arith.addf %124, %123 : vector<4x128xf32>
    %126 = arith.divf %124, %125 : vector<4x128xf32>
    %127 = math.tanh %121 : vector<4x128xf32>
    %128 = vector.extract_strided_slice %126 {offsets = [0, 0], sizes = [4, 32], strides = [1, 1]} : vector<4x128xf32> to vector<4x32xf32>
    %129 = vector.extract_strided_slice %126 {offsets = [0, 32], sizes = [4, 32], strides = [1, 1]} : vector<4x128xf32> to vector<4x32xf32>
    %130 = vector.extract_strided_slice %127 {offsets = [0, 64], sizes = [4, 32], strides = [1, 1]} : vector<4x128xf32> to vector<4x32xf32>
    %131 = vector.extract_strided_slice %126 {offsets = [0, 96], sizes = [4, 32], strides = [1, 1]} : vector<4x128xf32> to vector<4x32xf32>
    %132 = arith.mulf %129, %116 : vector<4x32xf32>
    %133 = arith.mulf %128, %130 : vector<4x32xf32>
    %134 = arith.addf %132, %133 : vector<4x32xf32>
    %135 = math.tanh %134 : vector<4x32xf32>
    %136 = arith.mulf %131, %135 : vector<4x32xf32>
    %137 = vector.extract_strided_slice %7 {offsets = [28, 0], sizes = [4, 128], strides = [1, 1]} : vector<32x128xf32> to vector<4x128xf32>
    %cst_21 = arith.constant dense<0.000000e+00> : vector<4x128xf32>
    %138 = tpu.matmul %136, %8, %cst_21 {dimension_numbers = #tpu.dot_dimension_numbers<[1], [0], [0], [1], [0, 0, 1, 1], [], []>} : vector<4x32xf32>, vector<32x128xf32>, vector<4x128xf32> -> vector<4x128xf32>
    %139 = arith.addf %137, %138 : vector<4x128xf32>
    %140 = arith.negf %139 : vector<4x128xf32>
    %141 = math.exp %140 : vector<4x128xf32>
    %cst_22 = arith.constant 1.000000e+00 : f32
    %142 = vector.broadcast %cst_22 : f32 to vector<4x128xf32>
    %143 = arith.addf %142, %141 : vector<4x128xf32>
    %144 = arith.divf %142, %143 : vector<4x128xf32>
    %145 = math.tanh %139 : vector<4x128xf32>
    %146 = vector.extract_strided_slice %144 {offsets = [0, 0], sizes = [4, 32], strides = [1, 1]} : vector<4x128xf32> to vector<4x32xf32>
    %147 = vector.extract_strided_slice %144 {offsets = [0, 32], sizes = [4, 32], strides = [1, 1]} : vector<4x128xf32> to vector<4x32xf32>
    %148 = vector.extract_strided_slice %145 {offsets = [0, 64], sizes = [4, 32], strides = [1, 1]} : vector<4x128xf32> to vector<4x32xf32>
    %149 = vector.extract_strided_slice %144 {offsets = [0, 96], sizes = [4, 32], strides = [1, 1]} : vector<4x128xf32> to vector<4x32xf32>
    %150 = arith.mulf %147, %134 : vector<4x32xf32>
    %151 = arith.mulf %146, %148 : vector<4x32xf32>
    %152 = arith.addf %150, %151 : vector<4x32xf32>
    %153 = math.tanh %152 : vector<4x32xf32>
    %154 = arith.mulf %149, %153 : vector<4x32xf32>
    %c0_23 = arith.constant 0 : index
    %c0_24 = arith.constant 0 : index
    %c0_25 = arith.constant 0 : index
    %155 = vector.load %arg3[%c0_23, %c0_24, %c0_25] : memref<2x4x32xf32, #tpu.memory_space<vmem>>, vector<1x4x32xf32>
    %156 = vector.shape_cast %155 : vector<1x4x32xf32> to vector<4x32xf32>
    %157 = vector.shape_cast %154 : vector<4x32xf32> to vector<1x4x32xf32>
    tpu.vector_store %arg3[%c0_23, %c0_24, %c0_25], %157 {strides = array<i32>} : memref<2x4x32xf32, #tpu.memory_space<vmem>>, vector<1x4x32xf32>,
    %c1 = arith.constant 1 : index
    %c0_26 = arith.constant 0 : index
    %c0_27 = arith.constant 0 : index
    %158 = vector.load %arg3[%c1, %c0_26, %c0_27] : memref<2x4x32xf32, #tpu.memory_space<vmem>>, vector<1x4x32xf32>
    %159 = vector.shape_cast %158 : vector<1x4x32xf32> to vector<4x32xf32>
    %160 = vector.shape_cast %152 : vector<4x32xf32> to vector<1x4x32xf32>
    tpu.vector_store %arg3[%c1, %c0_26, %c0_27], %160 {strides = array<i32>} : memref<2x4x32xf32, #tpu.memory_space<vmem>>, vector<1x4x32xf32>,
    return
  }
}

</mosaic_0001>

<llo_original>
// kernel: tpu_custom_call.1
$region0: #{tpu_custom_call.1}
  #allocation0 [shape = 'u32[]', space=smem, size = 0x4, offset = 0x4, fixed_abs, tag = 'smem constant byte address 0x4 - core index']
  #allocation1 [shape = 'u32[144,128]{1,0:T(1,128)}', space=vmem, size = 0x12000, scoped, tag = 'internal scratch']
  %s0 = inlined_call_operand.vmem [shape: s32[32,1], index: 0, kind: input, shape index: {}]
  %s1 = inlined_call_operand.hbm [shape: f32[50,128], index: 1, kind: input, shape index: {}]
  %s2 = inlined_call_operand.vmem [shape: f32[32,128], index: 2, kind: input, shape index: {}]
  %s3 = inlined_call_operand.hbm [shape: f32[2,4,32], index: 3, kind: output, shape index: {}]
  %s4 = sld [smem:[#allocation0]]
  $region26: #{tpu_custom_call.1} parent=0
    _
  %s6 = ssub.s32 1, %s4
  %s7 = scalar_select 0, %s6, %s4
  $region1: #{tpu_custom_call.1} parent=0
    #allocation2 [shape = 'u8[28672]{0}', space=vmem, size = 0x7000, scoped, tag = 'input window, operand 1, single buffered']
    #allocation3 [shape = 's32[1]{0}', space=sflag, size = 0x4, scoped, tag = 'scoped memory for tpu_custom_call.1']
    #allocation4 [shape = 's32[1]{0}', space=sflag, size = 0x4, scoped, tag = 'scoped memory for tpu_custom_call.1']
    #allocation5 [shape = 'u8[4096]{0}', space=vmem, size = 0x1000, scoped, tag = 'output window, operand 0, single buffered']
    %8 = vsyncpa [#allocation3], 0
    %9 = vsyncpa [#allocation4], 0
    // Predicated region
    $region2: #{tpu_custom_call.1} parent=1 // pred_check
      _
    $region3: #{tpu_custom_call.1} parent=1 // pred_check_branch
      %11 = sbr.rel (0) target = $region5
    $region4: #{tpu_custom_call.1} parent=1 // pred_region
      _
    $region5: #{tpu_custom_call.1} parent=1 // pred_fallthru
      _
    // Predicated region
    $region6: #{tpu_custom_call.1} parent=1 // pred_check
      _
    $region7: #{tpu_custom_call.1} parent=1 // pred_check_branch
      %13 = sbr.rel (0) target = $region9
    $region8: #{tpu_custom_call.1} parent=1 // pred_region
      %s15 = ssub.s32 896, 896
      %16 = vsyncadd [#allocation3], %s15
      %s17 = sshll.u32 [#allocation2], 4
      %s18 = int_to_ptr.vmem [resolvable:$true] %s17
      %23 = dma.hbm_to_vmem [thread:$0]  %s1, 896, %s18, [#allocation3], 128, 128, 8
    $region9: #{tpu_custom_call.1} parent=1 // pred_fallthru
      _
    // Predicated region
    $region10: #{tpu_custom_call.1} parent=1 // pred_check
      _
    $region11: #{tpu_custom_call.1} parent=1 // pred_check_branch
      %25 = sbr.rel (0) target = $region13
    $region12: #{tpu_custom_call.1} parent=1 // pred_region
      _
    $region13: #{tpu_custom_call.1} parent=1 // pred_fallthru
      _
    // Predicated region
    $region14: #{tpu_custom_call.1} parent=1 // pred_check
      _
    $region15: #{tpu_custom_call.1} parent=1 // pred_check_branch
      %27 = sbr.rel (0) target = $region17
    $region16: #{tpu_custom_call.1} parent=1 // pred_region
      %28 = dma.done [#allocation3], 896
    $region17: #{tpu_custom_call.1} parent=1 // pred_fallthru
      _
    %v29 = vld [vmem:[%s0] sm:$0xff]
    %v30 = vld [vmem:[%s0 + $0x8] sm:$0xff]
    %v31 = vld [vmem:[%s0 + $0x10] sm:$0xff]
    %v32 = vld [vmem:[%s0 + $0x18] sm:$0xff]
    %v33 = vlaneseq
    %v34 = vand.u32 %v33, 127
    %35 = vset.pattern.permute.xlu0 0
    %36 = vperm.xlu0 %35, %v29
    %v37 = vpop.permute.xlu0 %36
    %38 = vset.pattern.permute.xlu0 0
    %39 = vperm.xlu0 %38, %v30
    %v40 = vpop.permute.xlu0 %39
    %41 = vset.pattern.permute.xlu0 0
    %42 = vperm.xlu0 %41, %v31
    %v43 = vpop.permute.xlu0 %42
    %44 = vset.pattern.permute.xlu0 0
    %45 = vperm.xlu0 %44, %v32
    %v46 = vpop.permute.xlu0 %45
    %vm47 = vcmp.eq.s32.totalorder %v34, %v37
    %vm48 = vcmp.eq.s32.totalorder %v34, %v40
    %vm49 = vcmp.eq.s32.totalorder %v34, %v43
    %vm50 = vcmp.eq.s32.totalorder %v34, %v46
    %v51 = vsel %vm47, 1, 0
    %v52 = vsel %vm48, 1, 0
    %v53 = vsel %vm49, 1, 0
    %v54 = vsel %vm50, 1, 0
    %v55 = vcvt.s32.f32 %v51
    %v56 = vcvt.s32.f32 %v52
    %v57 = vcvt.s32.f32 %v53
    %v58 = vcvt.s32.f32 %v54
    %v59 = vld [vmem:[#allocation2] sm:$0xff]
    %v60 = vld [vmem:[#allocation2 + $0x8] sm:$0xff]
    %v61 = vld [vmem:[#allocation2 + $0x10] sm:$0xff]
    %v62 = vld [vmem:[#allocation2 + $0x18] sm:$0xff]
    %v63 = vld [vmem:[#allocation2 + $0x20] sm:$0xff]
    %v64 = vld [vmem:[#allocation2 + $0x28] sm:$0xff]
    %v65 = vld [vmem:[#allocation2 + $0x30] sm:$0x3]
    %vm66 = vcmask 408576
    %v68 = vsel %vm66, %v55, 0
    %v71 = vsel %vm66, %v56, 0
    %v74 = vsel %vm66, %v57, 0
    %v77 = vsel %vm66, %v58, 0
    %vm79 = vcmask 1041408
    %v81 = vsel %vm79, %v65, 0
    %83 = vmatprep.subr.mxu0 0.0
    %84 = vmatpush1.msra.mxu0 0.0
    %85 = vmatprep.subr.mxu0 0.0
    %86 = vmatpush1.msra.mxu0 0.0
    %87 = vmatprep.subr.mxu0 0.0
    %88 = vmatpush1.msra.mxu0 0.0
    %89 = vmatprep.subr.mxu0 0.0
    %90 = vmatpush1.msra.mxu0 0.0
    %91 = vmatprep.subr.mxu0 0.0
    %92 = vmatpush1.msra.mxu0 0.0
    %93 = vmatprep.subr.mxu0 0.0
    %94 = vmatpush1.msra.mxu0 0.0
    %95 = vmatprep.subr.mxu0 0.0
    %96 = vmatpush1.msra.mxu0 0.0
    %97 = vmatprep.subr.mxu0 0.0
    %98 = vmatpush1.msra.mxu0 0.0
    %99 = vmatprep.subr.mxu0 0.0
    %100 = vmatpush1.msra.mxu0 0.0
    %101 = vmatprep.subr.mxu0 0.0
    %102 = vmatpush1.msra.mxu0 %v81
    %103 = vmatprep.subr.mxu0 0.0
    %104 = vmatpush1.msra.mxu0 %v64
    %105 = vmatprep.subr.mxu0 0.0
    %106 = vmatpush1.msra.mxu0 %v63
    %107 = vmatprep.subr.mxu0 0.0
    %108 = vmatpush1.msra.mxu0 %v62
    %109 = vmatprep.subr.mxu0 0.0
    %110 = vmatpush1.msra.mxu0 %v61
    %111 = vmatprep.subr.mxu0 0.0
    %112 = vmatpush1.msra.mxu0 %v60
    %113 = vmatprep.subr.mxu0 0.0
    %114 = vmatpush1.msra.mxu0 %v59
    %115 = vmatprep.subr.mxu0 0.0
    %116 = vmatpush2.msra.mxu0 0.0
    %117 = vmatprep.subr.mxu0 0.0
    %118 = vmatpush2.msra.mxu0 0.0
    %119 = vmatprep.subr.mxu0 0.0
    %120 = vmatpush2.msra.mxu0 0.0
    %121 = vmatprep.subr.mxu0 0.0
    %122 = vmatpush2.msra.mxu0 0.0
    %123 = vmatprep.subr.mxu0 0.0
    %124 = vmatpush2.msra.mxu0 0.0
    %125 = vmatprep.subr.mxu0 0.0
    %126 = vmatpush2.msra.mxu0 0.0
    %127 = vmatprep.subr.mxu0 0.0
    %128 = vmatpush2.msra.mxu0 0.0
    %129 = vmatprep.subr.mxu0 0.0
    %130 = vmatpush2.msra.mxu0 0.0
    %131 = vmatprep.subr.mxu0 0.0
    %132 = vmatpush2.msra.mxu0 0.0
    %133 = vmatprep.subr.mxu0 0.0
    %134 = vmatpush2.msra.mxu0 0.0
    %135 = vmatprep.subr.mxu0 0.0
    %136 = vmatpush2.msra.mxu0 0.0
    %137 = vmatprep.subr.mxu0 0.0
    %138 = vmatpush2.msra.mxu0 0.0
    %139 = vmatprep.subr.mxu0 0.0
    %140 = vmatpush2.msra.mxu0 0.0
    %141 = vmatprep.subr.mxu0 0.0
    %142 = vmatpush2.msra.mxu0 0.0
    %143 = vmatprep.subr.mxu0 0.0
    %144 = vmatpush2.msra.mxu0 0.0
    %145 = vmatprep.subr.mxu0 0.0
    %146 = vmatpush2.msra.mxu0 0.0
    %147 = vmatprep.mubr.f32.mxu0 0.0
    %148 = vmatmul.mubr.f32.gmra.mxu0 %v68
    %v149 = vpop.f32.mrf.mxu0
    %v150 = vadd.f32 0.0, %v149
    %v151 = vpop.f32.mrf.mxu0
    %152 = vmatprep.mubr.f32.mxu0 0.0
    %153 = vmatmul.mubr.f32.gmra.mxu0 %v71
    %v154 = vpop.f32.mrf.mxu0
    %v155 = vadd.f32 0.0, %v154
    %v156 = vpop.f32.mrf.mxu0
    %157 = vmatprep.mubr.f32.mxu0 0.0
    %158 = vmatmul.mubr.f32.gmra.mxu0 %v74
    %v159 = vpop.f32.mrf.mxu0
    %v160 = vadd.f32 0.0, %v159
    %v161 = vpop.f32.mrf.mxu0
    %162 = vmatprep.mubr.f32.mxu0 0.0
    %163 = vmatmul.mubr.f32.gmra.mxu0 %v77
    %v164 = vpop.f32.mrf.mxu0
    %v165 = vadd.f32 0.0, %v164
    %v166 = vpop.f32.mrf.mxu0
    %167 = vdwg.mxu0
    %v168 = vld [vmem:[%s2] sm:$0xff]
    %v169 = vld [vmem:[%s2 + $0x8] sm:$0xff]
    %v170 = vld [vmem:[%s2 + $0x10] sm:$0xff]
    %v171 = vld [vmem:[%s2 + $0x18] sm:$0xff]
    %vm172 = vcmask 261120
    %v174 = vsel %vm172, 0.0, 0
    %176 = vmatprep.subr.mxu0 0.0
    %177 = vmatpush1.msra.mxu0 0.0
    %178 = vmatprep.subr.mxu0 0.0
    %179 = vmatpush1.msra.mxu0 0.0
    %180 = vmatprep.subr.mxu0 0.0
    %181 = vmatpush1.msra.mxu0 0.0
    %182 = vmatprep.subr.mxu0 0.0
    %183 = vmatpush1.msra.mxu0 0.0
    %184 = vmatprep.subr.mxu0 0.0
    %185 = vmatpush1.msra.mxu0 0.0
    %186 = vmatprep.subr.mxu0 0.0
    %187 = vmatpush1.msra.mxu0 0.0
    %188 = vmatprep.subr.mxu0 0.0
    %189 = vmatpush1.msra.mxu0 0.0
    %190 = vmatprep.subr.mxu0 0.0
    %191 = vmatpush1.msra.mxu0 0.0
    %192 = vmatprep.subr.mxu0 0.0
    %193 = vmatpush1.msra.mxu0 0.0
    %194 = vmatprep.subr.mxu0 0.0
    %195 = vmatpush1.msra.mxu0 0.0
    %196 = vmatprep.subr.mxu0 0.0
    %197 = vmatpush1.msra.mxu0 0.0
    %198 = vmatprep.subr.mxu0 0.0
    %199 = vmatpush1.msra.mxu0 0.0
    %200 = vmatprep.subr.mxu0 0.0
    %201 = vmatpush1.msra.mxu0 %v171
    %202 = vmatprep.subr.mxu0 0.0
    %203 = vmatpush1.msra.mxu0 %v170
    %204 = vmatprep.subr.mxu0 0.0
    %205 = vmatpush1.msra.mxu0 %v169
    %206 = vmatprep.subr.mxu0 0.0
    %207 = vmatpush1.msra.mxu0 %v168
    %208 = vmatprep.subr.mxu0 0.0
    %209 = vmatpush2.msra.mxu0 0.0
    %210 = vmatprep.subr.mxu0 0.0
    %211 = vmatpush2.msra.mxu0 0.0
    %212 = vmatprep.subr.mxu0 0.0
    %213 = vmatpush2.msra.mxu0 0.0
    %214 = vmatprep.subr.mxu0 0.0
    %215 = vmatpush2.msra.mxu0 0.0
    %216 = vmatprep.subr.mxu0 0.0
    %217 = vmatpush2.msra.mxu0 0.0
    %218 = vmatprep.subr.mxu0 0.0
    %219 = vmatpush2.msra.mxu0 0.0
    %220 = vmatprep.subr.mxu0 0.0
    %221 = vmatpush2.msra.mxu0 0.0
    %222 = vmatprep.subr.mxu0 0.0
    %223 = vmatpush2.msra.mxu0 0.0
    %224 = vmatprep.subr.mxu0 0.0
    %225 = vmatpush2.msra.mxu0 0.0
    %226 = vmatprep.subr.mxu0 0.0
    %227 = vmatpush2.msra.mxu0 0.0
    %228 = vmatprep.subr.mxu0 0.0
    %229 = vmatpush2.msra.mxu0 0.0
    %230 = vmatprep.subr.mxu0 0.0
    %231 = vmatpush2.msra.mxu0 0.0
    %232 = vmatprep.subr.mxu0 0.0
    %233 = vmatpush2.msra.mxu0 0.0
    %234 = vmatprep.subr.mxu0 0.0
    %235 = vmatpush2.msra.mxu0 0.0
    %236 = vmatprep.subr.mxu0 0.0
    %237 = vmatpush2.msra.mxu0 0.0
    %238 = vmatprep.subr.mxu0 0.0
    %239 = vmatpush2.msra.mxu0 0.0
    %240 = vmatprep.mubr.f32.mxu0 0.0
    %241 = vmatmul.mubr.f32.gmra.mxu0 %v174
    %v242 = vpop.f32.mrf.mxu0
    %v243 = vadd.f32 0.0, %v242
    %v244 = vpop.f32.mrf.mxu0
    %245 = vdwg.mxu0
    %v246 = vadd.f32 %v150, %v243
    %v247 = vxor.u32 %v246, 2147483648
    %v248 = vmul.f32 %v247, 1.442695
    %v249 = vpow.pop %v248
    %v250 = vadd.f32 %v249, 1.0
    %v251 = vrcp.pop %v250
    %v252 = vmul.f32 1.0, %v251
    %v253 = vtanh.pop %v246
    %v254 = vmul.f32 %v252, 0.0
    %256 = vrot.lane.b32.xlu0 %v253, 64
    %v257 = vpop.permute.xlu0 %256
    %v259 = vmul.f32 %v252, %v257
    %261 = vrot.lane.b32.xlu0 %v259, 32
    %v262 = vpop.permute.xlu0 %261
    %v264 = vadd.f32 %v254, %v262
    %v265 = vtanh.pop %v264
    %267 = vrot.lane.b32.xlu0 %v265, 64
    %v268 = vpop.permute.xlu0 %267
    %v270 = vmul.f32 %v252, %v268
    %272 = vrot.lane.b32.xlu0 %v270, 32
    %v273 = vpop.permute.xlu0 %272
    %v274 = vsel %vm172, %v273, 0
    %276 = vmatprep.subr.mxu0 0.0
    %277 = vmatpush1.msra.mxu0 0.0
    %278 = vmatprep.subr.mxu0 0.0
    %279 = vmatpush1.msra.mxu0 0.0
    %280 = vmatprep.subr.mxu0 0.0
    %281 = vmatpush1.msra.mxu0 0.0
    %282 = vmatprep.subr.mxu0 0.0
    %283 = vmatpush1.msra.mxu0 0.0
    %284 = vmatprep.subr.mxu0 0.0
    %285 = vmatpush1.msra.mxu0 0.0
    %286 = vmatprep.subr.mxu0 0.0
    %287 = vmatpush1.msra.mxu0 0.0
    %288 = vmatprep.subr.mxu0 0.0
    %289 = vmatpush1.msra.mxu0 0.0
    %290 = vmatprep.subr.mxu0 0.0
    %291 = vmatpush1.msra.mxu0 0.0
    %292 = vmatprep.subr.mxu0 0.0
    %293 = vmatpush1.msra.mxu0 0.0
    %294 = vmatprep.subr.mxu0 0.0
    %295 = vmatpush1.msra.mxu0 0.0
    %296 = vmatprep.subr.mxu0 0.0
    %297 = vmatpush1.msra.mxu0 0.0
    %298 = vmatprep.subr.mxu0 0.0
    %299 = vmatpush1.msra.mxu0 0.0
    %300 = vmatprep.subr.mxu0 0.0
    %301 = vmatpush1.msra.mxu0 %v171
    %302 = vmatprep.subr.mxu0 0.0
    %303 = vmatpush1.msra.mxu0 %v170
    %304 = vmatprep.subr.mxu0 0.0
    %305 = vmatpush1.msra.mxu0 %v169
    %306 = vmatprep.subr.mxu0 0.0
    %307 = vmatpush1.msra.mxu0 %v168
    %308 = vmatprep.subr.mxu0 0.0
    %309 = vmatpush2.msra.mxu0 0.0
    %310 = vmatprep.subr.mxu0 0.0
    %311 = vmatpush2.msra.mxu0 0.0
    %312 = vmatprep.subr.mxu0 0.0
    %313 = vmatpush2.msra.mxu0 0.0
    %314 = vmatprep.subr.mxu0 0.0
    %315 = vmatpush2.msra.mxu0 0.0
    %316 = vmatprep.subr.mxu0 0.0
    %317 = vmatpush2.msra.mxu0 0.0
    %318 = vmatprep.subr.mxu0 0.0
    %319 = vmatpush2.msra.mxu0 0.0
    %320 = vmatprep.subr.mxu0 0.0
    %321 = vmatpush2.msra.mxu0 0.0
    %322 = vmatprep.subr.mxu0 0.0
    %323 = vmatpush2.msra.mxu0 0.0
    %324 = vmatprep.subr.mxu0 0.0
    %325 = vmatpush2.msra.mxu0 0.0
    %326 = vmatprep.subr.mxu0 0.0
    %327 = vmatpush2.msra.mxu0 0.0
    %328 = vmatprep.subr.mxu0 0.0
    %329 = vmatpush2.msra.mxu0 0.0
    %330 = vmatprep.subr.mxu0 0.0
    %331 = vmatpush2.msra.mxu0 0.0
    %332 = vmatprep.subr.mxu0 0.0
    %333 = vmatpush2.msra.mxu0 0.0
    %334 = vmatprep.subr.mxu0 0.0
    %335 = vmatpush2.msra.mxu0 0.0
    %336 = vmatprep.subr.mxu0 0.0
    %337 = vmatpush2.msra.mxu0 0.0
    %338 = vmatprep.subr.mxu0 0.0
    %339 = vmatpush2.msra.mxu0 0.0
    %340 = vmatprep.mubr.f32.mxu0 0.0
    %341 = vmatmul.mubr.f32.gmra.mxu0 %v274
    %v342 = vpop.f32.mrf.mxu0
    %v343 = vadd.f32 0.0, %v342
    %v344 = vpop.f32.mrf.mxu0
    %345 = vdwg.mxu0
    %v347 = vrot.slane %v343, 4
    %v349 = vadd.f32 %v150, %v347
    %v350 = vxor.u32 %v349, 2147483648
    %v351 = vmul.f32 %v350, 1.442695
    %v352 = vpow.pop %v351
    %v353 = vadd.f32 %v352, 1.0
    %v354 = vrcp.pop %v353
    %v355 = vmul.f32 1.0, %v354
    %v356 = vtanh.pop %v349
    %v358 = vrot.slane %v264, 4
    %v360 = vmul.f32 %v355, %v358
    %362 = vrot.lane.b32.xlu0 %v356, 64
    %v363 = vpop.permute.xlu0 %362
    %v365 = vmul.f32 %v355, %v363
    %367 = vrot.lane.b32.xlu0 %v365, 32
    %v368 = vpop.permute.xlu0 %367
    %v370 = vadd.f32 %v360, %v368
    %v371 = vtanh.pop %v370
    %373 = vrot.lane.b32.xlu0 %v371, 64
    %v374 = vpop.permute.xlu0 %373
    %v376 = vmul.f32 %v355, %v374
    %v378 = vrot.slane %v376, 4
    %379 = vrot.lane.b32.xlu0 %v378, 32
    %v380 = vpop.permute.xlu0 %379
    %v381 = vsel %vm172, %v380, 0
    %383 = vmatprep.subr.mxu0 0.0
    %384 = vmatpush1.msra.mxu0 0.0
    %385 = vmatprep.subr.mxu0 0.0
    %386 = vmatpush1.msra.mxu0 0.0
    %387 = vmatprep.subr.mxu0 0.0
    %388 = vmatpush1.msra.mxu0 0.0
    %389 = vmatprep.subr.mxu0 0.0
    %390 = vmatpush1.msra.mxu0 0.0
    %391 = vmatprep.subr.mxu0 0.0
    %392 = vmatpush1.msra.mxu0 0.0
    %393 = vmatprep.subr.mxu0 0.0
    %394 = vmatpush1.msra.mxu0 0.0
    %395 = vmatprep.subr.mxu0 0.0
    %396 = vmatpush1.msra.mxu0 0.0
    %397 = vmatprep.subr.mxu0 0.0
    %398 = vmatpush1.msra.mxu0 0.0
    %399 = vmatprep.subr.mxu0 0.0
    %400 = vmatpush1.msra.mxu0 0.0
    %401 = vmatprep.subr.mxu0 0.0
    %402 = vmatpush1.msra.mxu0 0.0
    %403 = vmatprep.subr.mxu0 0.0
    %404 = vmatpush1.msra.mxu0 0.0
    %405 = vmatprep.subr.mxu0 0.0
    %406 = vmatpush1.msra.mxu0 0.0
    %407 = vmatprep.subr.mxu0 0.0
    %408 = vmatpush1.msra.mxu0 %v171
    %409 = vmatprep.subr.mxu0 0.0
    %410 = vmatpush1.msra.mxu0 %v170
    %411 = vmatprep.subr.mxu0 0.0
    %412 = vmatpush1.msra.mxu0 %v169
    %413 = vmatprep.subr.mxu0 0.0
    %414 = vmatpush1.msra.mxu0 %v168
    %415 = vmatprep.subr.mxu0 0.0
    %416 = vmatpush2.msra.mxu0 0.0
    %417 = vmatprep.subr.mxu0 0.0
    %418 = vmatpush2.msra.mxu0 0.0
    %419 = vmatprep.subr.mxu0 0.0
    %420 = vmatpush2.msra.mxu0 0.0
    %421 = vmatprep.subr.mxu0 0.0
    %422 = vmatpush2.msra.mxu0 0.0
    %423 = vmatprep.subr.mxu0 0.0
    %424 = vmatpush2.msra.mxu0 0.0
    %425 = vmatprep.subr.mxu0 0.0
    %426 = vmatpush2.msra.mxu0 0.0
    %427 = vmatprep.subr.mxu0 0.0
    %428 = vmatpush2.msra.mxu0 0.0
    %429 = vmatprep.subr.mxu0 0.0
    %430 = vmatpush2.msra.mxu0 0.0
    %431 = vmatprep.subr.mxu0 0.0
    %432 = vmatpush2.msra.mxu0 0.0
    %433 = vmatprep.subr.mxu0 0.0
    %434 = vmatpush2.msra.mxu0 0.0
    %435 = vmatprep.subr.mxu0 0.0
    %436 = vmatpush2.msra.mxu0 0.0
    %437 = vmatprep.subr.mxu0 0.0
    %438 = vmatpush2.msra.mxu0 0.0
    %439 = vmatprep.subr.mxu0 0.0
    %440 = vmatpush2.msra.mxu0 0.0
    %441 = vmatprep.subr.mxu0 0.0
    %442 = vmatpush2.msra.mxu0 0.0
    %443 = vmatprep.subr.mxu0 0.0
    %444 = vmatpush2.msra.mxu0 0.0
    %445 = vmatprep.subr.mxu0 0.0
    %446 = vmatpush2.msra.mxu0 0.0
    %447 = vmatprep.mubr.f32.mxu0 0.0
    %448 = vmatmul.mubr.f32.gmra.mxu0 %v381
    %v449 = vpop.f32.mrf.mxu0
    %v450 = vadd.f32 0.0, %v449
    %v451 = vpop.f32.mrf.mxu0
    %452 = vdwg.mxu0
    %v453 = vadd.f32 %v155, %v450
    %v454 = vxor.u32 %v453, 2147483648
    %v455 = vmul.f32 %v454, 1.442695
    %v456 = vpow.pop %v455
    %v457 = vadd.f32 %v456, 1.0
    %v458 = vrcp.pop %v457
    %v459 = vmul.f32 1.0, %v458
    %v460 = vtanh.pop %v453
    %v462 = vrot.slane %v370, 4
    %v464 = vmul.f32 %v459, %v462
    %466 = vrot.lane.b32.xlu0 %v460, 64
    %v467 = vpop.permute.xlu0 %466
    %v469 = vmul.f32 %v459, %v467
    %471 = vrot.lane.b32.xlu0 %v469, 32
    %v472 = vpop.permute.xlu0 %471
    %v474 = vadd.f32 %v464, %v472
    %v475 = vtanh.pop %v474
    %477 = vrot.lane.b32.xlu0 %v475, 64
    %v478 = vpop.permute.xlu0 %477
    %v480 = vmul.f32 %v459, %v478
    %482 = vrot.lane.b32.xlu0 %v480, 32
    %v483 = vpop.permute.xlu0 %482
    %v484 = vsel %vm172, %v483, 0
    %486 = vmatprep.subr.mxu0 0.0
    %487 = vmatpush1.msra.mxu0 0.0
    %488 = vmatprep.subr.mxu0 0.0
    %489 = vmatpush1.msra.mxu0 0.0
    %490 = vmatprep.subr.mxu0 0.0
    %491 = vmatpush1.msra.mxu0 0.0
    %492 = vmatprep.subr.mxu0 0.0
    %493 = vmatpush1.msra.mxu0 0.0
    %494 = vmatprep.subr.mxu0 0.0
    %495 = vmatpush1.msra.mxu0 0.0
    %496 = vmatprep.subr.mxu0 0.0
    %497 = vmatpush1.msra.mxu0 0.0
    %498 = vmatprep.subr.mxu0 0.0
    %499 = vmatpush1.msra.mxu0 0.0
    %500 = vmatprep.subr.mxu0 0.0
    %501 = vmatpush1.msra.mxu0 0.0
    %502 = vmatprep.subr.mxu0 0.0
    %503 = vmatpush1.msra.mxu0 0.0
    %504 = vmatprep.subr.mxu0 0.0
    %505 = vmatpush1.msra.mxu0 0.0
    %506 = vmatprep.subr.mxu0 0.0
    %507 = vmatpush1.msra.mxu0 0.0
    %508 = vmatprep.subr.mxu0 0.0
    %509 = vmatpush1.msra.mxu0 0.0
    %510 = vmatprep.subr.mxu0 0.0
    %511 = vmatpush1.msra.mxu0 %v171
    %512 = vmatprep.subr.mxu0 0.0
    %513 = vmatpush1.msra.mxu0 %v170
    %514 = vmatprep.subr.mxu0 0.0
    %515 = vmatpush1.msra.mxu0 %v169
    %516 = vmatprep.subr.mxu0 0.0
    %517 = vmatpush1.msra.mxu0 %v168
    %518 = vmatprep.subr.mxu0 0.0
    %519 = vmatpush2.msra.mxu0 0.0
    %520 = vmatprep.subr.mxu0 0.0
    %521 = vmatpush2.msra.mxu0 0.0
    %522 = vmatprep.subr.mxu0 0.0
    %523 = vmatpush2.msra.mxu0 0.0
    %524 = vmatprep.subr.mxu0 0.0
    %525 = vmatpush2.msra.mxu0 0.0
    %526 = vmatprep.subr.mxu0 0.0
    %527 = vmatpush2.msra.mxu0 0.0
    %528 = vmatprep.subr.mxu0 0.0
    %529 = vmatpush2.msra.mxu0 0.0
    %530 = vmatprep.subr.mxu0 0.0
    %531 = vmatpush2.msra.mxu0 0.0
    %532 = vmatprep.subr.mxu0 0.0
    %533 = vmatpush2.msra.mxu0 0.0
    %534 = vmatprep.subr.mxu0 0.0
    %535 = vmatpush2.msra.mxu0 0.0
    %536 = vmatprep.subr.mxu0 0.0
    %537 = vmatpush2.msra.mxu0 0.0
    %538 = vmatprep.subr.mxu0 0.0
    %539 = vmatpush2.msra.mxu0 0.0
    %540 = vmatprep.subr.mxu0 0.0
    %541 = vmatpush2.msra.mxu0 0.0
    %542 = vmatprep.subr.mxu0 0.0
    %543 = vmatpush2.msra.mxu0 0.0
    %544 = vmatprep.subr.mxu0 0.0
    %545 = vmatpush2.msra.mxu0 0.0
    %546 = vmatprep.subr.mxu0 0.0
    %547 = vmatpush2.msra.mxu0 0.0
    %548 = vmatprep.subr.mxu0 0.0
    %549 = vmatpush2.msra.mxu0 0.0
    %550 = vmatprep.mubr.f32.mxu0 0.0
    %551 = vmatmul.mubr.f32.gmra.mxu0 %v484
    %v552 = vpop.f32.mrf.mxu0
    %v553 = vadd.f32 0.0, %v552
    %v554 = vpop.f32.mrf.mxu0
    %555 = vdwg.mxu0
    %v557 = vrot.slane %v553, 4
    %v559 = vadd.f32 %v155, %v557
    %v560 = vxor.u32 %v559, 2147483648
    %v561 = vmul.f32 %v560, 1.442695
    %v562 = vpow.pop %v561
    %v563 = vadd.f32 %v562, 1.0
    %v564 = vrcp.pop %v563
    %v565 = vmul.f32 1.0, %v564
    %v566 = vtanh.pop %v559
    %v568 = vrot.slane %v474, 4
    %v570 = vmul.f32 %v565, %v568
    %572 = vrot.lane.b32.xlu0 %v566, 64
    %v573 = vpop.permute.xlu0 %572
    %v575 = vmul.f32 %v565, %v573
    %577 = vrot.lane.b32.xlu0 %v575, 32
    %v578 = vpop.permute.xlu0 %577
    %v580 = vadd.f32 %v570, %v578
    %v581 = vtanh.pop %v580
    %583 = vrot.lane.b32.xlu0 %v581, 64
    %v584 = vpop.permute.xlu0 %583
    %v586 = vmul.f32 %v565, %v584
    %v588 = vrot.slane %v586, 4
    %589 = vrot.lane.b32.xlu0 %v588, 32
    %v590 = vpop.permute.xlu0 %589
    %v591 = vsel %vm172, %v590, 0
    %593 = vmatprep.subr.mxu0 0.0
    %594 = vmatpush1.msra.mxu0 0.0
    %595 = vmatprep.subr.mxu0 0.0
    %596 = vmatpush1.msra.mxu0 0.0
    %597 = vmatprep.subr.mxu0 0.0
    %598 = vmatpush1.msra.mxu0 0.0
    %599 = vmatprep.subr.mxu0 0.0
    %600 = vmatpush1.msra.mxu0 0.0
    %601 = vmatprep.subr.mxu0 0.0
    %602 = vmatpush1.msra.mxu0 0.0
    %603 = vmatprep.subr.mxu0 0.0
    %604 = vmatpush1.msra.mxu0 0.0
    %605 = vmatprep.subr.mxu0 0.0
    %606 = vmatpush1.msra.mxu0 0.0
    %607 = vmatprep.subr.mxu0 0.0
    %608 = vmatpush1.msra.mxu0 0.0
    %609 = vmatprep.subr.mxu0 0.0
    %610 = vmatpush1.msra.mxu0 0.0
    %611 = vmatprep.subr.mxu0 0.0
    %612 = vmatpush1.msra.mxu0 0.0
    %613 = vmatprep.subr.mxu0 0.0
    %614 = vmatpush1.msra.mxu0 0.0
    %615 = vmatprep.subr.mxu0 0.0
    %616 = vmatpush1.msra.mxu0 0.0
    %617 = vmatprep.subr.mxu0 0.0
    %618 = vmatpush1.msra.mxu0 %v171
    %619 = vmatprep.subr.mxu0 0.0
    %620 = vmatpush1.msra.mxu0 %v170
    %621 = vmatprep.subr.mxu0 0.0
    %622 = vmatpush1.msra.mxu0 %v169
    %623 = vmatprep.subr.mxu0 0.0
    %624 = vmatpush1.msra.mxu0 %v168
    %625 = vmatprep.subr.mxu0 0.0
    %626 = vmatpush2.msra.mxu0 0.0
    %627 = vmatprep.subr.mxu0 0.0
    %628 = vmatpush2.msra.mxu0 0.0
    %629 = vmatprep.subr.mxu0 0.0
    %630 = vmatpush2.msra.mxu0 0.0
    %631 = vmatprep.subr.mxu0 0.0
    %632 = vmatpush2.msra.mxu0 0.0
    %633 = vmatprep.subr.mxu0 0.0
    %634 = vmatpush2.msra.mxu0 0.0
    %635 = vmatprep.subr.mxu0 0.0
    %636 = vmatpush2.msra.mxu0 0.0
    %637 = vmatprep.subr.mxu0 0.0
    %638 = vmatpush2.msra.mxu0 0.0
    %639 = vmatprep.subr.mxu0 0.0
    %640 = vmatpush2.msra.mxu0 0.0
    %641 = vmatprep.subr.mxu0 0.0
    %642 = vmatpush2.msra.mxu0 0.0
    %643 = vmatprep.subr.mxu0 0.0
    %644 = vmatpush2.msra.mxu0 0.0
    %645 = vmatprep.subr.mxu0 0.0
    %646 = vmatpush2.msra.mxu0 0.0
    %647 = vmatprep.subr.mxu0 0.0
    %648 = vmatpush2.msra.mxu0 0.0
    %649 = vmatprep.subr.mxu0 0.0
    %650 = vmatpush2.msra.mxu0 0.0
    %651 = vmatprep.subr.mxu0 0.0
    %652 = vmatpush2.msra.mxu0 0.0
    %653 = vmatprep.subr.mxu0 0.0
    %654 = vmatpush2.msra.mxu0 0.0
    %655 = vmatprep.subr.mxu0 0.0
    %656 = vmatpush2.msra.mxu0 0.0
    %657 = vmatprep.mubr.f32.mxu0 0.0
    %658 = vmatmul.mubr.f32.gmra.mxu0 %v591
    %v659 = vpop.f32.mrf.mxu0
    %v660 = vadd.f32 0.0, %v659
    %v661 = vpop.f32.mrf.mxu0
    %662 = vdwg.mxu0
    %v663 = vadd.f32 %v160, %v660
    %v664 = vxor.u32 %v663, 2147483648
    %v665 = vmul.f32 %v664, 1.442695
    %v666 = vpow.pop %v665
    %v667 = vadd.f32 %v666, 1.0
    %v668 = vrcp.pop %v667
    %v669 = vmul.f32 1.0, %v668
    %v670 = vtanh.pop %v663
    %v672 = vrot.slane %v580, 4
    %v674 = vmul.f32 %v669, %v672
    %676 = vrot.lane.b32.xlu0 %v670, 64
    %v677 = vpop.permute.xlu0 %676
    %v679 = vmul.f32 %v669, %v677
    %681 = vrot.lane.b32.xlu0 %v679, 32
    %v682 = vpop.permute.xlu0 %681
    %v684 = vadd.f32 %v674, %v682
    %v685 = vtanh.pop %v684
    %687 = vrot.lane.b32.xlu0 %v685, 64
    %v688 = vpop.permute.xlu0 %687
    %v690 = vmul.f32 %v669, %v688
    %692 = vrot.lane.b32.xlu0 %v690, 32
    %v693 = vpop.permute.xlu0 %692
    %v694 = vsel %vm172, %v693, 0
    %696 = vmatprep.subr.mxu0 0.0
    %697 = vmatpush1.msra.mxu0 0.0
    %698 = vmatprep.subr.mxu0 0.0
    %699 = vmatpush1.msra.mxu0 0.0
    %700 = vmatprep.subr.mxu0 0.0
    %701 = vmatpush1.msra.mxu0 0.0
    %702 = vmatprep.subr.mxu0 0.0
    %703 = vmatpush1.msra.mxu0 0.0
    %704 = vmatprep.subr.mxu0 0.0
    %705 = vmatpush1.msra.mxu0 0.0
    %706 = vmatprep.subr.mxu0 0.0
    %707 = vmatpush1.msra.mxu0 0.0
    %708 = vmatprep.subr.mxu0 0.0
    %709 = vmatpush1.msra.mxu0 0.0
    %710 = vmatprep.subr.mxu0 0.0
    %711 = vmatpush1.msra.mxu0 0.0
    %712 = vmatprep.subr.mxu0 0.0
    %713 = vmatpush1.msra.mxu0 0.0
    %714 = vmatprep.subr.mxu0 0.0
    %715 = vmatpush1.msra.mxu0 0.0
    %716 = vmatprep.subr.mxu0 0.0
    %717 = vmatpush1.msra.mxu0 0.0
    %718 = vmatprep.subr.mxu0 0.0
    %719 = vmatpush1.msra.mxu0 0.0
    %720 = vmatprep.subr.mxu0 0.0
    %721 = vmatpush1.msra.mxu0 %v171
    %722 = vmatprep.subr.mxu0 0.0
    %723 = vmatpush1.msra.mxu0 %v170
    %724 = vmatprep.subr.mxu0 0.0
    %725 = vmatpush1.msra.mxu0 %v169
    %726 = vmatprep.subr.mxu0 0.0
    %727 = vmatpush1.msra.mxu0 %v168
    %728 = vmatprep.subr.mxu0 0.0
    %729 = vmatpush2.msra.mxu0 0.0
    %730 = vmatprep.subr.mxu0 0.0
    %731 = vmatpush2.msra.mxu0 0.0
    %732 = vmatprep.subr.mxu0 0.0
    %733 = vmatpush2.msra.mxu0 0.0
    %734 = vmatprep.subr.mxu0 0.0
    %735 = vmatpush2.msra.mxu0 0.0
    %736 = vmatprep.subr.mxu0 0.0
    %737 = vmatpush2.msra.mxu0 0.0
    %738 = vmatprep.subr.mxu0 0.0
    %739 = vmatpush2.msra.mxu0 0.0
    %740 = vmatprep.subr.mxu0 0.0
    %741 = vmatpush2.msra.mxu0 0.0
    %742 = vmatprep.subr.mxu0 0.0
    %743 = vmatpush2.msra.mxu0 0.0
    %744 = vmatprep.subr.mxu0 0.0
    %745 = vmatpush2.msra.mxu0 0.0
    %746 = vmatprep.subr.mxu0 0.0
    %747 = vmatpush2.msra.mxu0 0.0
    %748 = vmatprep.subr.mxu0 0.0
    %749 = vmatpush2.msra.mxu0 0.0
    %750 = vmatprep.subr.mxu0 0.0
    %751 = vmatpush2.msra.mxu0 0.0
    %752 = vmatprep.subr.mxu0 0.0
    %753 = vmatpush2.msra.mxu0 0.0
    %754 = vmatprep.subr.mxu0 0.0
    %755 = vmatpush2.msra.mxu0 0.0
    %756 = vmatprep.subr.mxu0 0.0
    %757 = vmatpush2.msra.mxu0 0.0
    %758 = vmatprep.subr.mxu0 0.0
    %759 = vmatpush2.msra.mxu0 0.0
    %760 = vmatprep.mubr.f32.mxu0 0.0
    %761 = vmatmul.mubr.f32.gmra.mxu0 %v694
    %v762 = vpop.f32.mrf.mxu0
    %v763 = vadd.f32 0.0, %v762
    %v764 = vpop.f32.mrf.mxu0
    %765 = vdwg.mxu0
    %v767 = vrot.slane %v763, 4
    %v769 = vadd.f32 %v160, %v767
    %v770 = vxor.u32 %v769, 2147483648
    %v771 = vmul.f32 %v770, 1.442695
    %v772 = vpow.pop %v771
    %v773 = vadd.f32 %v772, 1.0
    %v774 = vrcp.pop %v773
    %v775 = vmul.f32 1.0, %v774
    %v776 = vtanh.pop %v769
    %v778 = vrot.slane %v684, 4
    %v780 = vmul.f32 %v775, %v778
    %782 = vrot.lane.b32.xlu0 %v776, 64
    %v783 = vpop.permute.xlu0 %782
    %v785 = vmul.f32 %v775, %v783
    %787 = vrot.lane.b32.xlu0 %v785, 32
    %v788 = vpop.permute.xlu0 %787
    %v790 = vadd.f32 %v780, %v788
    %v791 = vtanh.pop %v790
    %793 = vrot.lane.b32.xlu0 %v791, 64
    %v794 = vpop.permute.xlu0 %793
    %v796 = vmul.f32 %v775, %v794
    %v798 = vrot.slane %v796, 4
    %799 = vrot.lane.b32.xlu0 %v798, 32
    %v800 = vpop.permute.xlu0 %799
    %v801 = vsel %vm172, %v800, 0
    %803 = vmatprep.subr.mxu0 0.0
    %804 = vmatpush1.msra.mxu0 0.0
    %805 = vmatprep.subr.mxu0 0.0
    %806 = vmatpush1.msra.mxu0 0.0
    %807 = vmatprep.subr.mxu0 0.0
    %808 = vmatpush1.msra.mxu0 0.0
    %809 = vmatprep.subr.mxu0 0.0
    %810 = vmatpush1.msra.mxu0 0.0
    %811 = vmatprep.subr.mxu0 0.0
    %812 = vmatpush1.msra.mxu0 0.0
    %813 = vmatprep.subr.mxu0 0.0
    %814 = vmatpush1.msra.mxu0 0.0
    %815 = vmatprep.subr.mxu0 0.0
    %816 = vmatpush1.msra.mxu0 0.0
    %817 = vmatprep.subr.mxu0 0.0
    %818 = vmatpush1.msra.mxu0 0.0
    %819 = vmatprep.subr.mxu0 0.0
    %820 = vmatpush1.msra.mxu0 0.0
    %821 = vmatprep.subr.mxu0 0.0
    %822 = vmatpush1.msra.mxu0 0.0
    %823 = vmatprep.subr.mxu0 0.0
    %824 = vmatpush1.msra.mxu0 0.0
    %825 = vmatprep.subr.mxu0 0.0
    %826 = vmatpush1.msra.mxu0 0.0
    %827 = vmatprep.subr.mxu0 0.0
    %828 = vmatpush1.msra.mxu0 %v171
    %829 = vmatprep.subr.mxu0 0.0
    %830 = vmatpush1.msra.mxu0 %v170
    %831 = vmatprep.subr.mxu0 0.0
    %832 = vmatpush1.msra.mxu0 %v169
    %833 = vmatprep.subr.mxu0 0.0
    %834 = vmatpush1.msra.mxu0 %v168
    %835 = vmatprep.subr.mxu0 0.0
    %836 = vmatpush2.msra.mxu0 0.0
    %837 = vmatprep.subr.mxu0 0.0
    %838 = vmatpush2.msra.mxu0 0.0
    %839 = vmatprep.subr.mxu0 0.0
    %840 = vmatpush2.msra.mxu0 0.0
    %841 = vmatprep.subr.mxu0 0.0
    %842 = vmatpush2.msra.mxu0 0.0
    %843 = vmatprep.subr.mxu0 0.0
    %844 = vmatpush2.msra.mxu0 0.0
    %845 = vmatprep.subr.mxu0 0.0
    %846 = vmatpush2.msra.mxu0 0.0
    %847 = vmatprep.subr.mxu0 0.0
    %848 = vmatpush2.msra.mxu0 0.0
    %849 = vmatprep.subr.mxu0 0.0
    %850 = vmatpush2.msra.mxu0 0.0
    %851 = vmatprep.subr.mxu0 0.0
    %852 = vmatpush2.msra.mxu0 0.0
    %853 = vmatprep.subr.mxu0 0.0
    %854 = vmatpush2.msra.mxu0 0.0
    %855 = vmatprep.subr.mxu0 0.0
    %856 = vmatpush2.msra.mxu0 0.0
    %857 = vmatprep.subr.mxu0 0.0
    %858 = vmatpush2.msra.mxu0 0.0
    %859 = vmatprep.subr.mxu0 0.0
    %860 = vmatpush2.msra.mxu0 0.0
    %861 = vmatprep.subr.mxu0 0.0
    %862 = vmatpush2.msra.mxu0 0.0
    %863 = vmatprep.subr.mxu0 0.0
    %864 = vmatpush2.msra.mxu0 0.0
    %865 = vmatprep.subr.mxu0 0.0
    %866 = vmatpush2.msra.mxu0 0.0
    %867 = vmatprep.mubr.f32.mxu0 0.0
    %868 = vmatmul.mubr.f32.gmra.mxu0 %v801
    %v869 = vpop.f32.mrf.mxu0
    %v870 = vadd.f32 0.0, %v869
    %v871 = vpop.f32.mrf.mxu0
    %872 = vdwg.mxu0
    %v873 = vadd.f32 %v165, %v870
    %v874 = vxor.u32 %v873, 2147483648
    %v875 = vmul.f32 %v874, 1.442695
    %v876 = vpow.pop %v875
    %v877 = vadd.f32 %v876, 1.0
    %v878 = vrcp.pop %v877
    %v879 = vmul.f32 1.0, %v878
    %v880 = vtanh.pop %v873
    %v882 = vrot.slane %v790, 4
    %v884 = vmul.f32 %v879, %v882
    %886 = vrot.lane.b32.xlu0 %v880, 64
    %v887 = vpop.permute.xlu0 %886
    %v889 = vmul.f32 %v879, %v887
    %891 = vrot.lane.b32.xlu0 %v889, 32
    %v892 = vpop.permute.xlu0 %891
    %v894 = vadd.f32 %v884, %v892
    %v895 = vtanh.pop %v894
    %897 = vrot.lane.b32.xlu0 %v895, 64
    %v898 = vpop.permute.xlu0 %897
    %v900 = vmul.f32 %v879, %v898
    %902 = vrot.lane.b32.xlu0 %v900, 32
    %v903 = vpop.permute.xlu0 %902
    %v904 = vsel %vm172, %v903, 0
    %906 = vmatprep.subr.mxu0 0.0
    %907 = vmatpush1.msra.mxu0 0.0
    %908 = vmatprep.subr.mxu0 0.0
    %909 = vmatpush1.msra.mxu0 0.0
    %910 = vmatprep.subr.mxu0 0.0
    %911 = vmatpush1.msra.mxu0 0.0
    %912 = vmatprep.subr.mxu0 0.0
    %913 = vmatpush1.msra.mxu0 0.0
    %914 = vmatprep.subr.mxu0 0.0
    %915 = vmatpush1.msra.mxu0 0.0
    %916 = vmatprep.subr.mxu0 0.0
    %917 = vmatpush1.msra.mxu0 0.0
    %918 = vmatprep.subr.mxu0 0.0
    %919 = vmatpush1.msra.mxu0 0.0
    %920 = vmatprep.subr.mxu0 0.0
    %921 = vmatpush1.msra.mxu0 0.0
    %922 = vmatprep.subr.mxu0 0.0
    %923 = vmatpush1.msra.mxu0 0.0
    %924 = vmatprep.subr.mxu0 0.0
    %925 = vmatpush1.msra.mxu0 0.0
    %926 = vmatprep.subr.mxu0 0.0
    %927 = vmatpush1.msra.mxu0 0.0
    %928 = vmatprep.subr.mxu0 0.0
    %929 = vmatpush1.msra.mxu0 0.0
    %930 = vmatprep.subr.mxu0 0.0
    %931 = vmatpush1.msra.mxu0 %v171
    %932 = vmatprep.subr.mxu0 0.0
    %933 = vmatpush1.msra.mxu0 %v170
    %934 = vmatprep.subr.mxu0 0.0
    %935 = vmatpush1.msra.mxu0 %v169
    %936 = vmatprep.subr.mxu0 0.0
    %937 = vmatpush1.msra.mxu0 %v168
    %938 = vmatprep.subr.mxu0 0.0
    %939 = vmatpush2.msra.mxu0 0.0
    %940 = vmatprep.subr.mxu0 0.0
    %941 = vmatpush2.msra.mxu0 0.0
    %942 = vmatprep.subr.mxu0 0.0
    %943 = vmatpush2.msra.mxu0 0.0
    %944 = vmatprep.subr.mxu0 0.0
    %945 = vmatpush2.msra.mxu0 0.0
    %946 = vmatprep.subr.mxu0 0.0
    %947 = vmatpush2.msra.mxu0 0.0
    %948 = vmatprep.subr.mxu0 0.0
    %949 = vmatpush2.msra.mxu0 0.0
    %950 = vmatprep.subr.mxu0 0.0
    %951 = vmatpush2.msra.mxu0 0.0
    %952 = vmatprep.subr.mxu0 0.0
    %953 = vmatpush2.msra.mxu0 0.0
    %954 = vmatprep.subr.mxu0 0.0
    %955 = vmatpush2.msra.mxu0 0.0
    %956 = vmatprep.subr.mxu0 0.0
    %957 = vmatpush2.msra.mxu0 0.0
    %958 = vmatprep.subr.mxu0 0.0
    %959 = vmatpush2.msra.mxu0 0.0
    %960 = vmatprep.subr.mxu0 0.0
    %961 = vmatpush2.msra.mxu0 0.0
    %962 = vmatprep.subr.mxu0 0.0
    %963 = vmatpush2.msra.mxu0 0.0
    %964 = vmatprep.subr.mxu0 0.0
    %965 = vmatpush2.msra.mxu0 0.0
    %966 = vmatprep.subr.mxu0 0.0
    %967 = vmatpush2.msra.mxu0 0.0
    %968 = vmatprep.subr.mxu0 0.0
    %969 = vmatpush2.msra.mxu0 0.0
    %970 = vmatprep.mubr.f32.mxu0 0.0
    %971 = vmatmul.mubr.f32.gmra.mxu0 %v904
    %v972 = vpop.f32.mrf.mxu0
    %v973 = vadd.f32 0.0, %v972
    %v974 = vpop.f32.mrf.mxu0
    %975 = vdwg.mxu0
    %v977 = vrot.slane %v973, 4
    %v979 = vadd.f32 %v165, %v977
    %v980 = vxor.u32 %v979, 2147483648
    %v981 = vmul.f32 %v980, 1.442695
    %v982 = vpow.pop %v981
    %v983 = vadd.f32 %v982, 1.0
    %v984 = vrcp.pop %v983
    %v985 = vmul.f32 1.0, %v984
    %v986 = vtanh.pop %v979
    %v988 = vrot.slane %v894, 4
    %v990 = vmul.f32 %v985, %v988
    %992 = vrot.lane.b32.xlu0 %v986, 64
    %v993 = vpop.permute.xlu0 %992
    %v995 = vmul.f32 %v985, %v993
    %997 = vrot.lane.b32.xlu0 %v995, 32
    %v998 = vpop.permute.xlu0 %997
    %v1000 = vadd.f32 %v990, %v998
    %v1001 = vtanh.pop %v1000
    %1003 = vrot.lane.b32.xlu0 %v1001, 64
    %v1004 = vpop.permute.xlu0 %1003
    %v1006 = vmul.f32 %v985, %v1004
    %1008 = vrot.lane.b32.xlu0 %v1006, 32
    %v1009 = vpop.permute.xlu0 %1008
    %vm1011 = vcmask 261124
    %1012 = vst.msk [vmem:[#allocation5 - $0x4] sm:$0xf0] %vm1011, %v1009
    %1014 = vrot.lane.b32.xlu0 %v1000, 96
    %v1015 = vpop.permute.xlu0 %1014
    %s1017 = scalar_lea.vmem [#allocation5], 4
    %1018 = vst.msk [vmem:[%s1017 - $0x4] sm:$0xf0] %vm1011, %v1015
    // Predicated region
    $region18: #{tpu_custom_call.1} parent=1 // pred_check
      _
    $region19: #{tpu_custom_call.1} parent=1 // pred_check_branch
      %1020 = sbr.rel (0) target = $region21
    $region20: #{tpu_custom_call.1} parent=1 // pred_region
      %s1022 = ssub.s32 128, 128
      %1023 = vsyncadd [#allocation4], %s1022
      %s1024 = sshll.u32 [#allocation5], 4
      %s1025 = int_to_ptr.vmem [resolvable:$true] %s1024
      %1030 = dma.vmem_to_hbm [thread:$0]  %s1025, 128, %s3, [#allocation4], 64, 64, 4
    $region21: #{tpu_custom_call.1} parent=1 // pred_fallthru
      _
    // Predicated region
    $region22: #{tpu_custom_call.1} parent=1 // pred_check
      _
    $region23: #{tpu_custom_call.1} parent=1 // pred_check_branch
      %1032 = sbr.rel (0) target = $region25
    $region24: #{tpu_custom_call.1} parent=1 // pred_region
      %1033 = dma.done [#allocation4], 128
    $region25: #{tpu_custom_call.1} parent=1 // pred_fallthru
      _
    %1034 = vsyncpa [#allocation3], 1
    %1035 = vsyncpa [#allocation4], 1

</llo_original>
